<compile_context>
chip_gen: v6e
topology: v6e:2x2x1
jax: 0.10.0
libtpu: 0.0.40
codegen_flags: <defaults>
</compile_context>

<pallas_src>
import jax
import jax.numpy as jnp
from jax.experimental import pallas as pl
from jax.experimental.pallas import tpu as pltpu


def _make_input_embedding_kernel(TR):
    """Builds the kernel for a fixed rows-per-block TR (Python int)."""

    def kernel(tok_sm,            # (R_pad,) int32 token ids, SMEM (scalar prefetch)
               table_hbm,         # (V, D_pad) token table, left in HBM
               pos_hbm,           # (S_pad, D_pad) positional table, in HBM
               posid_ref,         # (TR, 1) int32 position ids for this block
               out_ref,           # (TR, D_pad) output block
               buf,               # (2*TR, D_pad) VMEM gather double buffer
               gsem,              # (2,) DMA semaphores, one per buffer slot
               pos_vmem,          # (S_pad, D_pad) VMEM copy of the pos table
               psem):             # DMA semaphore for the one-time pos copy
        i = pl.program_id(0)
        nb = pl.num_programs(0)

        def issue_gather(block, slot):
            base = block * TR
            dst0 = slot * TR

            @pl.loop(0, TR)
            def _(r):
                tok = tok_sm[base + r]
                pltpu.make_async_copy(
                    table_hbm.at[pl.ds(tok, 1)],
                    buf.at[pl.ds(dst0 + r, 1)],
                    gsem.at[slot],
                ).start()

        # First grid step: copy the positional table into VMEM once and prime
        # the gather pipeline for block 0.
        @pl.when(i == 0)
        def _():
            pltpu.make_async_copy(pos_hbm, pos_vmem, psem).start()
            issue_gather(0, 0)
            pltpu.make_async_copy(pos_hbm, pos_vmem, psem).wait()

        # Prefetch the next block's rows into the other buffer slot while this
        # block is being consumed.
        @pl.when(i + 1 < nb)
        def _():
            issue_gather(i + 1, (i + 1) % 2)

        # Wait for all TR row copies of the current slot.
        slot = i % 2
        cur0 = slot * TR

        @pl.loop(0, TR)
        def _(r):
            pltpu.make_async_copy(
                table_hbm.at[pl.ds(0, 1)],
                buf.at[pl.ds(cur0 + r, 1)],
                gsem.at[slot],
            ).wait()

        start = pl.multiple_of(slot * TR, 8)
        gathered = buf[pl.ds(start, TR), :].astype(jnp.float32)       # (TR, D_pad)

        # Positional rows for this block via a tiny one-hot MXU matmul over the
        # resident pos table; no jnp.tile, and TR need not be a multiple of S.
        S_pad = pos_vmem.shape[0]
        col = jax.lax.broadcasted_iota(jnp.int32, (TR, S_pad), 1)
        onehot = (posid_ref[...] == col).astype(pos_vmem.dtype)       # (TR, S_pad)
        pos_blk = jnp.dot(onehot, pos_vmem[...],
                          preferred_element_type=jnp.float32)         # (TR, D_pad)

        out_ref[...] = (gathered + pos_blk).astype(out_ref.dtype)

    return kernel


def input_embedding(tokens, token_table, pos_table=None, *, target_block_rows=256):
    """tokens: (B, S) int; token_table: (V, D); pos_table: (S, D) or None.

    Returns (B, S, D) = token_table[tokens] (+ pos_table broadcast over batch).
    """
    B, S = tokens.shape
    V, D = token_table.shape
    out_dtype = token_table.dtype
    itemsize = jnp.dtype(out_dtype).itemsize

    if pos_table is None:              # use_positional=False -> add a zero row
        pos_table = jnp.zeros((1, D), dtype=out_dtype)
    S_pos, D_pos = pos_table.shape
    assert D_pos == D and (S_pos == 1 or S_pos == S)

    D_pad = pl.cdiv(D, 128) * 128
    S_pad = pl.cdiv(S_pos, 128) * 128

    # Rows per block: multiple of the output dtype's packed-sublane tile,
    # independent of S, capped by the (padded) total number of rows.
    sub = max(8, 32 // itemsize)            # 8 for f32, 16 for bf16, 32 for int8
    R = B * S
    target = max(sub, (max(target_block_rows, sub) // sub) * sub)
    TR = min(target, pl.cdiv(R, sub) * sub)
    num_blocks = pl.cdiv(R, TR)
    R_pad = num_blocks * TR

    # Token ids: flatten, clamp in-bounds (PyTorch raises on OOB ids; the DMA
    # gather must never address outside the table), pad to R_pad.
    tok_flat = jnp.clip(tokens.reshape(R).astype(jnp.int32), 0, V - 1)
    tok_flat = jnp.pad(tok_flat, (0, R_pad - R))

    # Per-row position ids (row -> row % S), streamed as a (TR, 1) column.
    posid_col = (jnp.arange(R_pad, dtype=jnp.int32) % S_pos).reshape(R_pad, 1)

    # Lane-dense padding of the tables (no-op when D is already 128-aligned).
    table_p = token_table if D == D_pad else jnp.pad(token_table,
                                                     ((0, 0), (0, D_pad - D)))
    pos_p = jnp.pad(pos_table.astype(out_dtype),
                    ((0, S_pad - S_pos), (0, D_pad - D)))

    # Honest VMEM estimate of what is actually resident (no vocab table on
    # this path), capped by the reported device VMEM capacity.
    est = (2 * TR * D_pad * itemsize        # gather double buffer
           + S_pad * D_pad * itemsize       # resident positional table
           + 2 * TR * D_pad * itemsize      # double-buffered output block
           + 2 * TR * 128 * 4               # streamed (TR, 1) position ids
           + TR * S_pad * itemsize          # one-hot intermediate
           + 2 * TR * D_pad * 4)            # f32 gathered / pos intermediates
    try:
        vmem_cap = pltpu.get_tpu_info().vmem_capacity_bytes
    except Exception:
        vmem_cap = 64 * 1024 * 1024         # conservative (v7x per-core VMEM)
    vmem_limit = int(min(0.9 * vmem_cap, max(2 * est, 32 * 1024 * 1024)))

    out = pl.pallas_call(
        _make_input_embedding_kernel(TR),
        out_shape=jax.ShapeDtypeStruct((R_pad, D_pad), out_dtype),
        grid_spec=pltpu.PrefetchScalarGridSpec(
            num_scalar_prefetch=1,
            grid=(num_blocks,),
            in_specs=[
                pl.BlockSpec(memory_space=pl.ANY),                  # token table (HBM)
                pl.BlockSpec(memory_space=pl.ANY),                  # pos table (HBM)
                pl.BlockSpec((TR, 1), lambda i, tok: (i, 0)),       # position ids
            ],
            out_specs=pl.BlockSpec((TR, D_pad), lambda i, tok: (i, 0)),
            scratch_shapes=[
                pltpu.VMEM((2 * TR, D_pad), out_dtype),             # gather buffer
                pltpu.SemaphoreType.DMA((2,)),                      # per-slot sems
                pltpu.VMEM((S_pad, D_pad), out_dtype),              # resident pos
                pltpu.SemaphoreType.DMA,                            # pos copy sem
            ],
        ),
        compiler_params=pltpu.CompilerParams(
            # Manual cross-step prefetch assumes in-order grid execution.
            dimension_semantics=("arbitrary",),
            vmem_limit_bytes=vmem_limit,
        ),
    )(tok_flat, table_p, pos_p, posid_col)

    return out[:R, :D].reshape(B, S, D)


def reference(tokens, token_table, pos_table):
    return token_table[tokens] + pos_table[None, :, :]


if __name__ == "__main__":
    # Small shapes consistent with the module: vocab=32, sequence_len=8, dim=32.
    B, S, V, D = 2, 8, 32, 32

    key = jax.random.PRNGKey(0)
    k_tok, k_tbl, k_pos = jax.random.split(key, 3)

    token_table = jax.random.normal(k_tbl, (V, D), dtype=jnp.float32)
    token_table = token_table.at[0].set(0.0)     # padding_idx=0 -> zero row
    pos_table = jax.random.normal(k_pos, (S, D), dtype=jnp.float32)
    tokens = jax.random.randint(k_tok, (B, S), 0, V, dtype=jnp.int32)

    out = jax.block_until_ready(input_embedding(tokens, token_table, pos_table))

    ref = reference(tokens, token_table, pos_table)
    assert out.shape == (B, S, D)
    assert jnp.allclose(out, ref, atol=1e-5, rtol=1e-5), "mismatch vs reference"

    print("KERNEL_OK")
</pallas_src>

<mosaic_0001>
module attributes {stable_mosaic.version = 11 : i64} {
  func.func @kernel(%arg0: i32, %arg1: memref<16xi32, #tpu.memory_space<smem>>, %arg2: memref<32x128xf32, #tpu.memory_space<any>>, %arg3: memref<128x128xf32, #tpu.memory_space<any>>, %arg4: memref<16x1xi32, #tpu.memory_space<vmem>>, %arg5: memref<16x128xf32, #tpu.memory_space<vmem>>, %arg6: memref<32x128xf32, #tpu.memory_space<vmem>>, %arg7: memref<2x!tpu.dma_semaphore, #tpu.memory_space<semaphore_mem>>, %arg8: memref<128x128xf32, #tpu.memory_space<vmem>>, %arg9: memref<!tpu.dma_semaphore, #tpu.memory_space<semaphore_mem>>) attributes {dimension_semantics = [#tpu.dimension_semantics<arbitrary>], iteration_bounds = array<i64: 1>, scalar_prefetch = 1 : i64, scratch_operands = 4 : i64, tpu.core_type = #tpu.core_type<tc>, window_params = [{}, {}, {transform_indices = @transform_2, window_bounds = array<i64: 16, 1>}, {transform_indices = @transform_3, window_bounds = array<i64: 16, 128>}]} {
    %c0_i32 = arith.constant 0 : i32
    %0 = arith.cmpi eq, %arg0, %c0_i32 : i32
    %1 = arith.extui %0 : i1 to i32
    %c0_i32_0 = arith.constant 0 : i32
    %2 = arith.cmpi ne, %1, %c0_i32_0 : i32
    scf.if %2 {
      tpu.enqueue_dma source(%arg3 : memref<128x128xf32, #tpu.memory_space<any>>) target(%arg8 : memref<128x128xf32, #tpu.memory_space<vmem>>) target_semaphore(%arg9 : memref<!tpu.dma_semaphore, #tpu.memory_space<semaphore_mem>>)
      %c0_i32_19 = arith.constant 0 : i32
      %c16_i32_20 = arith.constant 16 : i32
      %33 = arith.addi %c0_i32_19, %c16_i32_20 : i32
      %c1_i32_21 = arith.constant 1 : i32
      scf.for %arg10 = %c0_i32_19 to %33 step %c1_i32_21  : i32 {
        %c1_i32_23 = arith.constant 1 : i32
        %34 = arith.muli %arg10, %c1_i32_23 : i32
        %c0_i32_24 = arith.constant 0 : i32
        %35 = arith.addi %c0_i32_24, %34 : i32
        %c0_i32_25 = arith.constant 0 : i32
        %36 = arith.addi %c0_i32_25, %35 : i32
        %37 = arith.index_cast %36 : i32 to index
        %38 = memref.load %arg1[%37] : memref<16xi32, #tpu.memory_space<smem>>
        %c0_i32_26 = arith.constant 0 : i32
        %39 = arith.addi %c0_i32_26, %35 : i32
        %c0_i32_27 = arith.constant 0 : i32
        %c0_i32_28 = arith.constant 0 : i32
        %40 = tpu.memref_slice %arg2[%38, %c0_i32_28] : memref<32x128xf32, #tpu.memory_space<any>> -> memref<1x128xf32, #tpu.memory_space<any>>
        %c0_i32_29 = arith.constant 0 : i32
        %41 = tpu.memref_slice %arg6[%39, %c0_i32_29] : memref<32x128xf32, #tpu.memory_space<vmem>> -> memref<1x128xf32, #tpu.memory_space<vmem>>
        %42 = tpu.memref_slice %arg7[%c0_i32_27] : memref<2x!tpu.dma_semaphore, #tpu.memory_space<semaphore_mem>> -> memref<1x!tpu.dma_semaphore, #tpu.memory_space<semaphore_mem>>
        %43 = tpu.memref_squeeze %42 : memref<1x!tpu.dma_semaphore, #tpu.memory_space<semaphore_mem>> -> memref<!tpu.dma_semaphore, #tpu.memory_space<semaphore_mem>>
        tpu.enqueue_dma source(%40 : memref<1x128xf32, #tpu.memory_space<any>>) target(%41 : memref<1x128xf32, #tpu.memory_space<vmem>>) target_semaphore(%43 : memref<!tpu.dma_semaphore, #tpu.memory_space<semaphore_mem>>)
      }
      %c16_i32_22 = arith.constant 16 : i32
      tpu.wait_dma2 semaphore(%arg9 : memref<!tpu.dma_semaphore, #tpu.memory_space<semaphore_mem>>) src(%arg3 : memref<128x128xf32, #tpu.memory_space<any>>) dst(%arg8 : memref<128x128xf32, #tpu.memory_space<vmem>>)
    } else {
    }
    %c1_i32 = arith.constant 1 : i32
    %3 = arith.addi %arg0, %c1_i32 : i32
    %c1_i32_1 = arith.constant 1 : i32
    %4 = arith.cmpi slt, %3, %c1_i32_1 : i32
    %5 = arith.extui %4 : i1 to i32
    %c0_i32_2 = arith.constant 0 : i32
    %6 = arith.cmpi ne, %5, %c0_i32_2 : i32
    scf.if %6 {
      %c1_i32_19 = arith.constant 1 : i32
      %33 = arith.addi %arg0, %c1_i32_19 : i32
      %c1_i32_20 = arith.constant 1 : i32
      %34 = arith.addi %arg0, %c1_i32_20 : i32
      %c2_i32_21 = arith.constant 2 : i32
      %c0_i32_22 = arith.constant 0 : i32
      %35 = arith.cmpi eq, %c2_i32_21, %c0_i32_22 : i32
      %c1_i32_23 = arith.constant 1 : i32
      %36 = arith.select %35, %c1_i32_23, %c2_i32_21 : i32
      %37 = arith.remsi %34, %36 : i32
      %c0_i32_24 = arith.constant 0 : i32
      %38 = arith.cmpi ne, %37, %c0_i32_24 : i32
      %c0_i32_25 = arith.constant 0 : i32
      %39 = arith.cmpi slt, %37, %c0_i32_25 : i32
      %c0_i32_26 = arith.constant 0 : i32
      %40 = arith.cmpi slt, %36, %c0_i32_26 : i32
      %41 = arith.xori %39, %40 : i1
      %42 = arith.andi %41, %38 : i1
      %43 = arith.addi %37, %36 : i32
      %44 = arith.select %42, %43, %37 : i32
      %c16_i32_27 = arith.constant 16 : i32
      %45 = arith.muli %33, %c16_i32_27 : i32
      %c16_i32_28 = arith.constant 16 : i32
      %46 = arith.muli %44, %c16_i32_28 : i32
      %c0_i32_29 = arith.constant 0 : i32
      %c16_i32_30 = arith.constant 16 : i32
      %47 = arith.addi %c0_i32_29, %c16_i32_30 : i32
      %c1_i32_31 = arith.constant 1 : i32
      scf.for %arg10 = %c0_i32_29 to %47 step %c1_i32_31  : i32 {
        %c1_i32_33 = arith.constant 1 : i32
        %48 = arith.muli %arg10, %c1_i32_33 : i32
        %c0_i32_34 = arith.constant 0 : i32
        %49 = arith.addi %c0_i32_34, %48 : i32
        %50 = arith.addi %45, %49 : i32
        %51 = arith.index_cast %50 : i32 to index
        %52 = memref.load %arg1[%51] : memref<16xi32, #tpu.memory_space<smem>>
        %53 = arith.addi %46, %49 : i32
        %c0_i32_35 = arith.constant 0 : i32
        %54 = tpu.memref_slice %arg2[%52, %c0_i32_35] : memref<32x128xf32, #tpu.memory_space<any>> -> memref<1x128xf32, #tpu.memory_space<any>>
        %c0_i32_36 = arith.constant 0 : i32
        %55 = tpu.memref_slice %arg6[%53, %c0_i32_36] : memref<32x128xf32, #tpu.memory_space<vmem>> -> memref<1x128xf32, #tpu.memory_space<vmem>>
        %56 = tpu.memref_slice %arg7[%44] : memref<2x!tpu.dma_semaphore, #tpu.memory_space<semaphore_mem>> -> memref<1x!tpu.dma_semaphore, #tpu.memory_space<semaphore_mem>>
        %57 = tpu.memref_squeeze %56 : memref<1x!tpu.dma_semaphore, #tpu.memory_space<semaphore_mem>> -> memref<!tpu.dma_semaphore, #tpu.memory_space<semaphore_mem>>
        tpu.enqueue_dma source(%54 : memref<1x128xf32, #tpu.memory_space<any>>) target(%55 : memref<1x128xf32, #tpu.memory_space<vmem>>) target_semaphore(%57 : memref<!tpu.dma_semaphore, #tpu.memory_space<semaphore_mem>>)
      }
      %c16_i32_32 = arith.constant 16 : i32
    } else {
    }
    %c2_i32 = arith.constant 2 : i32
    %c0_i32_3 = arith.constant 0 : i32
    %7 = arith.cmpi eq, %c2_i32, %c0_i32_3 : i32
    %c1_i32_4 = arith.constant 1 : i32
    %8 = arith.select %7, %c1_i32_4, %c2_i32 : i32
    %9 = arith.remsi %arg0, %8 : i32
    %c0_i32_5 = arith.constant 0 : i32
    %10 = arith.cmpi ne, %9, %c0_i32_5 : i32
    %c0_i32_6 = arith.constant 0 : i32
    %11 = arith.cmpi slt, %9, %c0_i32_6 : i32
    %c0_i32_7 = arith.constant 0 : i32
    %12 = arith.cmpi slt, %8, %c0_i32_7 : i32
    %13 = arith.xori %11, %12 : i1
    %14 = arith.andi %13, %10 : i1
    %15 = arith.addi %9, %8 : i32
    %16 = arith.select %14, %15, %9 : i32
    %c16_i32 = arith.constant 16 : i32
    %17 = arith.muli %16, %c16_i32 : i32
    %c0_i32_8 = arith.constant 0 : i32
    %c16_i32_9 = arith.constant 16 : i32
    %18 = arith.addi %c0_i32_8, %c16_i32_9 : i32
    %c1_i32_10 = arith.constant 1 : i32
    scf.for %arg10 = %c0_i32_8 to %18 step %c1_i32_10  : i32 {
      %c1_i32_19 = arith.constant 1 : i32
      %33 = arith.muli %arg10, %c1_i32_19 : i32
      %c0_i32_20 = arith.constant 0 : i32
      %34 = arith.addi %c0_i32_20, %33 : i32
      %35 = arith.addi %17, %34 : i32
      %c0_i32_21 = arith.constant 0 : i32
      %c0_i32_22 = arith.constant 0 : i32
      %36 = tpu.memref_slice %arg2[%c0_i32_21, %c0_i32_22] : memref<32x128xf32, #tpu.memory_space<any>> -> memref<1x128xf32, #tpu.memory_space<any>>
      %c0_i32_23 = arith.constant 0 : i32
      %37 = tpu.memref_slice %arg6[%35, %c0_i32_23] : memref<32x128xf32, #tpu.memory_space<vmem>> -> memref<1x128xf32, #tpu.memory_space<vmem>>
      %38 = tpu.memref_slice %arg7[%16] : memref<2x!tpu.dma_semaphore, #tpu.memory_space<semaphore_mem>> -> memref<1x!tpu.dma_semaphore, #tpu.memory_space<semaphore_mem>>
      %39 = tpu.memref_squeeze %38 : memref<1x!tpu.dma_semaphore, #tpu.memory_space<semaphore_mem>> -> memref<!tpu.dma_semaphore, #tpu.memory_space<semaphore_mem>>
      tpu.wait_dma2 semaphore(%39 : memref<!tpu.dma_semaphore, #tpu.memory_space<semaphore_mem>>) src(%36 : memref<1x128xf32, #tpu.memory_space<any>>) dst(%37 : memref<1x128xf32, #tpu.memory_space<vmem>>)
    }
    %c16_i32_11 = arith.constant 16 : i32
    %c16_i32_12 = arith.constant 16 : i32
    %19 = arith.muli %16, %c16_i32_12 : i32
    %20 = tpu.assume_multiple %19, 8 : i32
    %21 = arith.index_cast %20 : i32 to index
    %c0 = arith.constant 0 : index
    %22 = vector.load %arg6[%21, %c0] : memref<32x128xf32, #tpu.memory_space<vmem>>, vector<16x128xf32>
    %23 = tpu.iota {dimensions = array<i32: 1>} : vector<16x128xi32>
    %c0_13 = arith.constant 0 : index
    %c0_14 = arith.constant 0 : index
    %24 = vector.load %arg4[%c0_13, %c0_14] : memref<16x1xi32, #tpu.memory_space<vmem>>, vector<16x1xi32>
    %25 = vector.broadcast %24 : vector<16x1xi32> to vector<16x128xi32>
    %26 = arith.cmpi eq, %25, %23 : vector<16x128xi32>
    %27 = arith.extui %26 : vector<16x128xi1> to vector<16x128xi32>
    %28 = arith.sitofp %27 : vector<16x128xi32> to vector<16x128xf32>
    %c0_15 = arith.constant 0 : index
    %c0_16 = arith.constant 0 : index
    %29 = vector.load %arg8[%c0_15, %c0_16] : memref<128x128xf32, #tpu.memory_space<vmem>>, vector<128x128xf32>
    %cst = arith.constant dense<0.000000e+00> : vector<16x128xf32>
    %30 = tpu.matmul %28, %29, %cst {dimension_numbers = #tpu.dot_dimension_numbers<[1], [0], [0], [1], [0, 0, 1, 1], [], []>} : vector<16x128xf32>, vector<128x128xf32>, vector<16x128xf32> -> vector<16x128xf32>
    %31 = arith.addf %22, %30 : vector<16x128xf32>
    %c0_17 = arith.constant 0 : index
    %c0_18 = arith.constant 0 : index
    %32 = vector.load %arg5[%c0_17, %c0_18] : memref<16x128xf32, #tpu.memory_space<vmem>>, vector<16x128xf32>
    tpu.vector_store %arg5[%c0_17, %c0_18], %31 {strides = array<i32>} : memref<16x128xf32, #tpu.memory_space<vmem>>, vector<16x128xf32>,
    return
  }
  func.func @transform_2(%arg0: i32, %arg1: memref<16xi32, #tpu.memory_space<smem>>) -> (i32, i32) {
    %c0_i32 = arith.constant 0 : i32
    %c0_i32_0 = arith.constant 0 : i32
    return %arg0, %c0_i32 : i32, i32
  }
  func.func @transform_3(%arg0: i32, %arg1: memref<16xi32, #tpu.memory_space<smem>>) -> (i32, i32) {
    %c0_i32 = arith.constant 0 : i32
    %c0_i32_0 = arith.constant 0 : i32
    return %arg0, %c0_i32 : i32, i32
  }
}

</mosaic_0001>

<llo_original>
// kernel: tpu_custom_call.1
$region0: #{tpu_custom_call.1}
  #allocation0 [shape = 'u32[]', space=smem, size = 0x4, offset = 0x4, fixed_abs, tag = 'smem constant byte address 0x4 - core index']
  #allocation1 [shape = 'u32[144,128]{1,0:T(1,128)}', space=vmem, size = 0x12000, scoped, tag = 'internal scratch']
  #allocation2 [shape = 'f32[32,128]{1,0:T(8,128)}', space=vmem, size = 0x4000, scoped, tag = 'scratch operand']
  #allocation3 [shape = 's32[2]{0}', space=sflag, size = 0x8, scoped, tag = 'scratch operand']
  #allocation4 [shape = 'f32[128,128]{1,0:T(8,128)}', space=vmem, size = 0x10000, scoped, tag = 'scratch operand']
  #allocation5 [shape = 's32[1]{0}', space=sflag, size = 0x4, scoped, tag = 'scratch operand']
  #allocation6 [shape = 's32[1]{0}', space=sflag, size = 0x4, scoped, tag = 'scoped memory for tpu_custom_call.1']
  #allocation7 [shape = 'u8[512]{0}', space=smem, size = 0x200, scoped, tag = 'prefetched SMEM operand 0']
  #allocation10 [shape = 's32[]', space=sflag, size = 0x4, offset = 0, fixed_abs, tag = 'sflag constant byte address 0x0 - dummy sync flag']
  #allocation11 [shape = 's32[]', space=sflag, size = 0x4, offset = 0, fixed_abs, tag = 'sflag constant byte address 0x0 - dummy sync flag']
  #allocation12 [shape = 'u32[]', space=smem, size = 0x4, offset = 0x44, fixed_abs, tag = 'smem constant byte address 0x44 - assertion arg 0']
  #allocation13 [shape = 'u32[]', space=smem, size = 0x4, offset = 0x48, fixed_abs, tag = 'smem constant byte address 0x48 - assertion arg 1']
  #allocation14 [shape = 's32[]', space=sflag, size = 0x4, offset = 0, fixed_abs, tag = 'sflag constant byte address 0x0 - dummy sync flag']
  #allocation15 [shape = 's32[]', space=sflag, size = 0x4, offset = 0, fixed_abs, tag = 'sflag constant byte address 0x0 - dummy sync flag']
  #allocation16 [shape = 's32[]', space=sflag, size = 0x4, offset = 0, fixed_abs, tag = 'sflag constant byte address 0x0 - dummy sync flag']
  #allocation17 [shape = 's32[]', space=sflag, size = 0x4, offset = 0, fixed_abs, tag = 'sflag constant byte address 0x0 - dummy sync flag']
  %s0 = inlined_call_operand.vmem [shape: s32[16], index: 0, kind: input, shape index: {}]
  %s1 = inlined_call_operand.hbm [shape: f32[32,128], index: 1, kind: input, shape index: {}]
  %s2 = inlined_call_operand.hbm [shape: f32[128,128], index: 2, kind: input, shape index: {}]
  %s3 = inlined_call_operand.vmem [shape: s32[16,1], index: 3, kind: input, shape index: {}]
  %s4 = inlined_call_operand.hbm [shape: f32[16,128], index: 4, kind: output, shape index: {}]
  %s5 = sld [smem:[#allocation0]]
  $region55: #{tpu_custom_call.1} parent=0
    _
  %s7 = ssub.s32 1, %s5
  %s8 = scalar_select 0, %s7, %s5
  %s9 = sshll.u32 %s0, 4
  %s10 = int_to_ptr.vmem [resolvable:$true] %s9
  %12 = dma.vmem_to_smem %s10, 16, [#allocation7], [#allocation6]
  %13 = dma.done [#allocation6], 16
  %14 = sfence
  $region1: #{tpu_custom_call.1} parent=0
    #allocation8 [shape = 'u8[8192]{0}', space=vmem, size = 0x2000, scoped, tag = 'output window, operand 0, single buffered']
    #allocation9 [shape = 's32[1]{0}', space=sflag, size = 0x4, scoped, tag = 'scoped memory for tpu_custom_call.1']
    %15 = vsyncpa [#allocation9], 0
    // Predicated region
    $region2: #{tpu_custom_call.1} parent=1 // pred_check
      _
    $region3: #{tpu_custom_call.1} parent=1 // pred_check_branch
      %17 = sbr.rel (0) target = $region5
    $region4: #{tpu_custom_call.1} parent=1 // pred_region
      _
    $region5: #{tpu_custom_call.1} parent=1 // pred_fallthru
      _
    %p18 = scmp.eq.s32.totalorder 0, 0
    // Predicated region
    $region6: #{tpu_custom_call.1} parent=1 // pred_check
      %p19 = pneg %p18
    $region7: #{tpu_custom_call.1} parent=1 // pred_check_branch
      %21 = sbr.rel (%p19) target = $region9
    $region8: #{tpu_custom_call.1} parent=1 // pred_region
      // Predicated region
      $region10: #{tpu_custom_call.1} parent=8 // pred_check
        _
      $region11: #{tpu_custom_call.1} parent=8 // pred_check_branch
        %23 = sbr.rel target = $region13
      $region12: #{tpu_custom_call.1} parent=8 // pred_region
        %24 = sst [smem:[#allocation12]] [#allocation11]
        %25 = sst [smem:[#allocation13]] [#allocation10]
      $region13: #{tpu_custom_call.1} parent=8 // pred_fallthru
        _
      %27 = shalt.err (0)
      %s29 = sshll.u32 [#allocation4], 4
      %s30 = int_to_ptr.vmem [resolvable:$true] %s29
      %32 = dma.hbm_to_vmem [thread:$0]  %s2, 2048, %s30, [#allocation5]
      loop: start=0, step=1, limit=16
      $region14: #{tpu_custom_call.1} parent=8 // loop_pre_header
        _
      $region15: #{tpu_custom_call.1} parent=8 // loop_header
        %s34 = sphi 0, %s38
        %p35 = scmp.ge.s32.totalorder %s34, 16
      $region16: #{tpu_custom_call.1} parent=8 // loop_header_branch
        %37 = sbr.rel (%p35) target = $region20
      $region17: #{tpu_custom_call.1} parent=8 // loop_body
        %s39 = sld [smem:[#allocation7 + %s34]]
        %s40 = smul.addr %s39, 16
        %s41 = scalar_lea.hbm %s1, %s40
        %s42 = scalar_lea.vmem [#allocation2], %s34
        // Predicated region
        $region21: #{tpu_custom_call.1} parent=17 // pred_check
          _
        $region22: #{tpu_custom_call.1} parent=17 // pred_check_branch
          %44 = sbr.rel target = $region24
        $region23: #{tpu_custom_call.1} parent=17 // pred_region
          %45 = sst [smem:[#allocation12]] [#allocation15]
          %46 = sst [smem:[#allocation13]] [#allocation14]
        $region24: #{tpu_custom_call.1} parent=17 // pred_fallthru
          _
        %48 = shalt.err (0)
        %s50 = sshll.u32 %s42, 4
        %s51 = int_to_ptr.vmem [resolvable:$true] %s50
        %53 = dma.hbm_to_vmem [thread:$0]  %s41, 16, %s51, [#allocation3]
      $region18: #{tpu_custom_call.1} parent=8 // loop_footer
        %s38 = sadd.s32 1, %s34
      $region19: #{tpu_custom_call.1} parent=8 // loop_footer_branch
        %33 = sbr.rel target = $region15
      $region20: #{tpu_custom_call.1} parent=8 // loop_exit
        _
      %s54 = smul.u32 128, 1
      %s55 = sshll.u32 %s54, 4
      %56 = dma.done [#allocation5], %s55
    $region9: #{tpu_custom_call.1} parent=1 // pred_fallthru
      _
    %s57 = sadd.s32 0, 1
    %p58 = scmp.lt.s32.totalorder %s57, 1
    // Predicated region
    $region25: #{tpu_custom_call.1} parent=1 // pred_check
      %p59 = pneg %p58
    $region26: #{tpu_custom_call.1} parent=1 // pred_check_branch
      %61 = sbr.rel (%p59) target = $region28
    $region27: #{tpu_custom_call.1} parent=1 // pred_region
      %p62 = scmp.lt.s32.totalorder %s57, 0
      %s63 = ssub.s32 0, %s57
      %s64 = scalar_select %p62, %s63, %s57
      %s65 = sand.u32 %s64, 1
      %s66 = ssub.s32 0, %s65
      %s67 = scalar_select %p62, %s66, %s65
      %p68 = scmp.ne.s32.totalorder %s67, 0
      %p69 = scmp.lt.s32.totalorder %s67, 0
      %p70 = pnand %p69, %p68
      %p71 = pneg %p70
      %s72 = sadd.s32 %s67, 2
      %s73 = scalar_select %p71, %s72, %s67
      %s74 = smul.u32 %s57, 16
      %s75 = smul.u32 %s73, 16
      loop: start=0, step=1, limit=16
      $region29: #{tpu_custom_call.1} parent=27 // loop_pre_header
        _
      $region30: #{tpu_custom_call.1} parent=27 // loop_header
        %s77 = sphi 0, %s81
        %p78 = scmp.ge.s32.totalorder %s77, 16
      $region31: #{tpu_custom_call.1} parent=27 // loop_header_branch
        %80 = sbr.rel (%p78) target = $region35
      $region32: #{tpu_custom_call.1} parent=27 // loop_body
        %s82 = sadd.s32 %s74, %s77
        %s83 = sld [smem:[#allocation7 + %s82]]
        %s84 = sadd.s32 %s75, %s77
        %s85 = smul.addr %s83, 16
        %s86 = scalar_lea.hbm %s1, %s85
        %s87 = scalar_lea.vmem [#allocation2], %s84
        %s88 = scalar_lea.sflag [#allocation3], %s73
        // Predicated region
        $region36: #{tpu_custom_call.1} parent=32 // pred_check
          _
        $region37: #{tpu_custom_call.1} parent=32 // pred_check_branch
          %90 = sbr.rel target = $region39
        $region38: #{tpu_custom_call.1} parent=32 // pred_region
          %91 = sst [smem:[#allocation12]] [#allocation17]
          %92 = sst [smem:[#allocation13]] [#allocation16]
        $region39: #{tpu_custom_call.1} parent=32 // pred_fallthru
          _
        %94 = shalt.err (0)
        %s96 = sshll.u32 %s87, 4
        %s97 = int_to_ptr.vmem [resolvable:$true] %s96
        %99 = dma.hbm_to_vmem [thread:$0]  %s86, 16, %s97, %s88
      $region33: #{tpu_custom_call.1} parent=27 // loop_footer
        %s81 = sadd.s32 1, %s77
      $region34: #{tpu_custom_call.1} parent=27 // loop_footer_branch
        %76 = sbr.rel target = $region30
      $region35: #{tpu_custom_call.1} parent=27 // loop_exit
        _
    $region28: #{tpu_custom_call.1} parent=1 // pred_fallthru
      _
    %s100 = ssub.s32 0, 0
    %s101 = ssub.s32 0, 0
    %p102 = scmp.ne.s32.totalorder 0, 0
    %p103 = scmp.lt.s32.totalorder 0, 0
    %p104 = pnand %p103, %p102
    %p105 = pneg %p104
    %s106 = sadd.s32 0, 2
    %s107 = scalar_select %p105, %s106, 0
    %s108 = smul.u32 %s107, 16
    loop: start=0, step=1, limit=16
    $region40: #{tpu_custom_call.1} parent=1 // loop_pre_header
      _
    $region41: #{tpu_custom_call.1} parent=1 // loop_header
      %s110 = sphi 0, %s114
      %p111 = scmp.ge.s32.totalorder %s110, 16
    $region42: #{tpu_custom_call.1} parent=1 // loop_header_branch
      %113 = sbr.rel (%p111) target = $region46
    $region43: #{tpu_custom_call.1} parent=1 // loop_body
      %s115 = scalar_lea.sflag [#allocation3], %s107
      %s116 = smul.u32 1, 1
      %s117 = sshll.u32 %s116, 4
      %118 = dma.done %s115, %s117
    $region44: #{tpu_custom_call.1} parent=1 // loop_footer
      %s114 = sadd.s32 1, %s110
    $region45: #{tpu_custom_call.1} parent=1 // loop_footer_branch
      %109 = sbr.rel target = $region41
    $region46: #{tpu_custom_call.1} parent=1 // loop_exit
      _
    %s119 = scalar_lea.vmem [#allocation2], %s108
    %v120 = vld [vmem:[%s119] sm:$0xff]
    %v121 = vld [vmem:[%s119 + $0x8] sm:$0xff]
    %v122 = vlaneseq
    %v123 = vand.u32 %v122, 127
    %v124 = vld [vmem:[%s3] sm:$0xff]
    %v125 = vld [vmem:[%s3 + $0x8] sm:$0xff]
    %126 = vset.pattern.permute.xlu0 0
    %127 = vperm.xlu0 %126, %v124
    %v128 = vpop.permute.xlu0 %127
    %129 = vset.pattern.permute.xlu0 0
    %130 = vperm.xlu0 %129, %v125
    %v131 = vpop.permute.xlu0 %130
    %vm132 = vcmp.eq.s32.totalorder %v128, %v123
    %vm133 = vcmp.eq.s32.totalorder %v131, %v123
    %v134 = vsel %vm132, 1, 0
    %v135 = vsel %vm133, 1, 0
    %v136 = vcvt.s32.f32 %v134
    %v137 = vcvt.s32.f32 %v135
    %v138 = vld [vmem:[#allocation4] sm:$0xff]
    %v139 = vld [vmem:[#allocation4 + $0x8] sm:$0xff]
    %v140 = vld [vmem:[#allocation4 + $0x10] sm:$0xff]
    %v141 = vld [vmem:[#allocation4 + $0x18] sm:$0xff]
    %v142 = vld [vmem:[#allocation4 + $0x20] sm:$0xff]
    %v143 = vld [vmem:[#allocation4 + $0x28] sm:$0xff]
    %v144 = vld [vmem:[#allocation4 + $0x30] sm:$0xff]
    %v145 = vld [vmem:[#allocation4 + $0x38] sm:$0xff]
    %v146 = vld [vmem:[#allocation4 + $0x40] sm:$0xff]
    %v147 = vld [vmem:[#allocation4 + $0x48] sm:$0xff]
    %v148 = vld [vmem:[#allocation4 + $0x50] sm:$0xff]
    %v149 = vld [vmem:[#allocation4 + $0x58] sm:$0xff]
    %v150 = vld [vmem:[#allocation4 + $0x60] sm:$0xff]
    %v151 = vld [vmem:[#allocation4 + $0x68] sm:$0xff]
    %v152 = vld [vmem:[#allocation4 + $0x70] sm:$0xff]
    %v153 = vld [vmem:[#allocation4 + $0x78] sm:$0xff]
    %154 = vmatprep.subr.mxu0 0.0
    %155 = vmatpush1.msra.mxu0 %v153
    %156 = vmatprep.subr.mxu0 0.0
    %157 = vmatpush1.msra.mxu0 %v152
    %158 = vmatprep.subr.mxu0 0.0
    %159 = vmatpush1.msra.mxu0 %v151
    %160 = vmatprep.subr.mxu0 0.0
    %161 = vmatpush1.msra.mxu0 %v150
    %162 = vmatprep.subr.mxu0 0.0
    %163 = vmatpush1.msra.mxu0 %v149
    %164 = vmatprep.subr.mxu0 0.0
    %165 = vmatpush1.msra.mxu0 %v148
    %166 = vmatprep.subr.mxu0 0.0
    %167 = vmatpush1.msra.mxu0 %v147
    %168 = vmatprep.subr.mxu0 0.0
    %169 = vmatpush1.msra.mxu0 %v146
    %170 = vmatprep.subr.mxu0 0.0
    %171 = vmatpush1.msra.mxu0 %v145
    %172 = vmatprep.subr.mxu0 0.0
    %173 = vmatpush1.msra.mxu0 %v144
    %174 = vmatprep.subr.mxu0 0.0
    %175 = vmatpush1.msra.mxu0 %v143
    %176 = vmatprep.subr.mxu0 0.0
    %177 = vmatpush1.msra.mxu0 %v142
    %178 = vmatprep.subr.mxu0 0.0
    %179 = vmatpush1.msra.mxu0 %v141
    %180 = vmatprep.subr.mxu0 0.0
    %181 = vmatpush1.msra.mxu0 %v140
    %182 = vmatprep.subr.mxu0 0.0
    %183 = vmatpush1.msra.mxu0 %v139
    %184 = vmatprep.subr.mxu0 0.0
    %185 = vmatpush1.msra.mxu0 %v138
    %186 = vmatprep.subr.mxu0 0.0
    %187 = vmatpush2.msra.mxu0 0.0
    %188 = vmatprep.subr.mxu0 0.0
    %189 = vmatpush2.msra.mxu0 0.0
    %190 = vmatprep.subr.mxu0 0.0
    %191 = vmatpush2.msra.mxu0 0.0
    %192 = vmatprep.subr.mxu0 0.0
    %193 = vmatpush2.msra.mxu0 0.0
    %194 = vmatprep.subr.mxu0 0.0
    %195 = vmatpush2.msra.mxu0 0.0
    %196 = vmatprep.subr.mxu0 0.0
    %197 = vmatpush2.msra.mxu0 0.0
    %198 = vmatprep.subr.mxu0 0.0
    %199 = vmatpush2.msra.mxu0 0.0
    %200 = vmatprep.subr.mxu0 0.0
    %201 = vmatpush2.msra.mxu0 0.0
    %202 = vmatprep.subr.mxu0 0.0
    %203 = vmatpush2.msra.mxu0 0.0
    %204 = vmatprep.subr.mxu0 0.0
    %205 = vmatpush2.msra.mxu0 0.0
    %206 = vmatprep.subr.mxu0 0.0
    %207 = vmatpush2.msra.mxu0 0.0
    %208 = vmatprep.subr.mxu0 0.0
    %209 = vmatpush2.msra.mxu0 0.0
    %210 = vmatprep.subr.mxu0 0.0
    %211 = vmatpush2.msra.mxu0 0.0
    %212 = vmatprep.subr.mxu0 0.0
    %213 = vmatpush2.msra.mxu0 0.0
    %214 = vmatprep.subr.mxu0 0.0
    %215 = vmatpush2.msra.mxu0 0.0
    %216 = vmatprep.subr.mxu0 0.0
    %217 = vmatpush2.msra.mxu0 0.0
    %218 = vmatprep.mubr.f32.mxu0 0.0
    %219 = vmatmul.mubr.f32.gmra.mxu0 %v136
    %v220 = vpop.f32.mrf.mxu0
    %v221 = vadd.f32 0.0, %v220
    %v222 = vpop.f32.mrf.mxu0
    %223 = vmatprep.mubr.f32.mxu0 0.0
    %224 = vmatmul.mubr.f32.gmra.mxu0 %v137
    %v225 = vpop.f32.mrf.mxu0
    %v226 = vadd.f32 0.0, %v225
    %v227 = vpop.f32.mrf.mxu0
    %228 = vdwg.mxu0
    %v229 = vadd.f32 %v120, %v221
    %v230 = vadd.f32 %v121, %v226
    %231 = vst [vmem:[#allocation8] sm:$0xff] %v229
    %232 = vst [vmem:[#allocation8 + $0x8] sm:$0xff] %v230
    // Predicated region
    $region47: #{tpu_custom_call.1} parent=1 // pred_check
      _
    $region48: #{tpu_custom_call.1} parent=1 // pred_check_branch
      %234 = sbr.rel (0) target = $region50
    $region49: #{tpu_custom_call.1} parent=1 // pred_region
      %s236 = ssub.s32 256, 256
      %237 = vsyncadd [#allocation9], %s236
      %s238 = sshll.u32 [#allocation8], 4
      %s239 = int_to_ptr.vmem [resolvable:$true] %s238
      %244 = dma.vmem_to_hbm [thread:$0]  %s239, 256, %s4, [#allocation9], 128, 128, 8
    $region50: #{tpu_custom_call.1} parent=1 // pred_fallthru
      _
    // Predicated region
    $region51: #{tpu_custom_call.1} parent=1 // pred_check
      _
    $region52: #{tpu_custom_call.1} parent=1 // pred_check_branch
      %246 = sbr.rel (0) target = $region54
    $region53: #{tpu_custom_call.1} parent=1 // pred_region
      %247 = dma.done [#allocation9], 256
    $region54: #{tpu_custom_call.1} parent=1 // pred_fallthru
      _
    %248 = vsyncpa [#allocation9], 1
  %249 = vsyncmov [#allocation3]
  %s250 = vpop.sfrf %249
  %p251 = scmp.eq.s32.totalorder %s250, 0
  %p252 = pneg %p251
  %254 = shalt.err (%p252)
  %s255 = scalar_lea.sflag [#allocation3], 1
  %256 = vsyncmov %s255
  %s257 = vpop.sfrf %256
  %p258 = scmp.eq.s32.totalorder %s257, 0
  %p259 = pneg %p258
  %261 = shalt.err (%p259)
  %262 = vsyncmov [#allocation5]
  %s263 = vpop.sfrf %262
  %p264 = scmp.eq.s32.totalorder %s263, 0
  %p265 = pneg %p264
  %267 = shalt.err (%p265)

</llo_original>
